<compile_context>
chip_gen: v5e
topology: v5e:2x2
jax: 0.10.0
libtpu: 0.0.40
codegen_flags: <defaults>
</compile_context>

<pallas_src>
import functools
import math

import jax
import jax.numpy as jnp
from jax import lax
from jax.experimental import pallas as pl
from jax.experimental.pallas import tpu as pltpu


# ---------------------------------------------------------------------------
# Fused kernel: per-batch Q/K/V projection + masked attention + join_heads
# ---------------------------------------------------------------------------
def _fused_attn_kernel(xq_ref, xk_ref, xv_ref, m_ref,
                       wq_ref, bq_ref, wk_ref, bk_ref, wv_ref, bv_ref,
                       o_ref, *, num_heads, d_qk, d_v, scale):
    xq = xq_ref[0]                       # (Lq, d_pre_q) f32
    xk = xk_ref[0]                       # (Lk, d_pre_k) f32
    xv = xv_ref[0]                       # (Lk, d_pre_v) f32
    mask = m_ref[0] != 0                 # (1, Lk) bool key mask

    # Q/K/V projections on the MXU, f32 accumulation.
    q = jnp.dot(xq, wq_ref[...], preferred_element_type=jnp.float32) + bq_ref[...]
    k = jnp.dot(xk, wk_ref[...], preferred_element_type=jnp.float32) + bk_ref[...]
    v = jnp.dot(xv, wv_ref[...], preferred_element_type=jnp.float32) + bv_ref[...]

    # Fold 1/sqrt(d_qk) into q, then drop matmul operands to bf16.
    q_bf = (q * scale).astype(jnp.bfloat16)     # (Lq, H*d_qk)
    k_bf = k.astype(jnp.bfloat16)                # (Lk, H*d_qk)
    v_bf = v.astype(jnp.bfloat16)                # (Lk, H*d_v)

    head_outs = []
    for h in range(num_heads):                   # static unroll over heads
        q_h = q_bf[:, h * d_qk:(h + 1) * d_qk]   # (Lq, d_qk)
        k_h = k_bf[:, h * d_qk:(h + 1) * d_qk]   # (Lk, d_qk)
        v_h = v_bf[:, h * d_v:(h + 1) * d_v]     # (Lk, d_v)

        # QK^T: contract the last dims directly (no transpose of K).
        logits = lax.dot_general(
            q_h, k_h, (((1,), (1,)), ((), ())),
            preferred_element_type=jnp.float32)  # (Lq, Lk) f32

        # Key mask broadcast over queries; -inf matches torch semantics
        # (fully-masked rows would produce NaN, same as the PyTorch module).
        logits = jnp.where(mask, logits, -jnp.inf)

        # Softmax over keys in f32; divide via approx reciprocal (EUP slot).
        row_max = jnp.max(logits, axis=-1, keepdims=True)
        p = jnp.exp(logits - row_max)
        denom = jnp.sum(p, axis=-1, keepdims=True)
        probs = p * pl.reciprocal(denom, approx=True)
        # attn_dropout is identity in eval mode.

        head_outs.append(
            jnp.dot(probs.astype(jnp.bfloat16), v_h,
                    preferred_element_type=jnp.float32))   # (Lq, d_v) f32

    # join_heads inside the kernel: one lane-dense store of (Lq, H*d_v).
    o_ref[0] = jnp.concatenate(head_outs, axis=-1).astype(o_ref.dtype)


def attention_seq_to_masked_forward(params, pre_qs, pre_ks, pre_vs, k_mask,
                                    num_heads, d_qk, d_v):
    """params holds pre-transposed weights wq_t/wk_t/wv_t (in, out) and
    row-vector biases bq/bk/bv (1, out).  Returns (B, Lq, num_heads*d_v)."""
    B, Lq, d_pre_q = pre_qs.shape
    _, Lk, d_pre_k = pre_ks.shape
    d_pre_v = pre_vs.shape[2]
    Hqk = num_heads * d_qk
    Hv = num_heads * d_v
    scale = 1.0 / math.sqrt(d_qk)

    mask = k_mask.astype(jnp.int32).reshape(B, 1, Lk)

    kern = functools.partial(_fused_attn_kernel, num_heads=num_heads,
                             d_qk=d_qk, d_v=d_v, scale=scale)

    return pl.pallas_call(
        kern,
        out_shape=jax.ShapeDtypeStruct((B, Lq, Hv), jnp.float32),
        grid=(B,),
        in_specs=[
            pl.BlockSpec((1, Lq, d_pre_q), lambda b: (b, 0, 0)),
            pl.BlockSpec((1, Lk, d_pre_k), lambda b: (b, 0, 0)),
            pl.BlockSpec((1, Lk, d_pre_v), lambda b: (b, 0, 0)),
            pl.BlockSpec((1, 1, Lk), lambda b: (b, 0, 0)),
            # Weights/biases: constant index_map -> stay resident in VMEM
            # across grid steps (no re-DMA).
            pl.BlockSpec((d_pre_q, Hqk), lambda b: (0, 0)),
            pl.BlockSpec((1, Hqk), lambda b: (0, 0)),
            pl.BlockSpec((d_pre_k, Hqk), lambda b: (0, 0)),
            pl.BlockSpec((1, Hqk), lambda b: (0, 0)),
            pl.BlockSpec((d_pre_v, Hv), lambda b: (0, 0)),
            pl.BlockSpec((1, Hv), lambda b: (0, 0)),
        ],
        out_specs=pl.BlockSpec((1, Lq, Hv), lambda b: (b, 0, 0)),
        compiler_params=pltpu.CompilerParams(
            dimension_semantics=("parallel",)),
    )(pre_qs, pre_ks, pre_vs, mask,
      params["wq_t"], params["bq"], params["wk_t"], params["bk"],
      params["wv_t"], params["bv"])


def prepare_params(torch_params):
    """One-time prep outside the hot path: transpose PyTorch Linear weights
    (out, in) -> (in, out) and reshape biases to row vectors."""
    return {
        "wq_t": jnp.transpose(torch_params["wq"]),
        "bq": torch_params["bq"].reshape(1, -1),
        "wk_t": jnp.transpose(torch_params["wk"]),
        "bk": torch_params["bk"].reshape(1, -1),
        "wv_t": jnp.transpose(torch_params["wv"]),
        "bv": torch_params["bv"].reshape(1, -1),
    }


# ---------------------------------------------------------------------------
# Plain-JAX reference (f32 everywhere) for sanity check
# ---------------------------------------------------------------------------
def _split_heads(x, num_heads):
    B, L, HD = x.shape
    d = HD // num_heads
    return jnp.transpose(x.reshape(B, L, num_heads, d), (0, 2, 1, 3))


def _join_heads(x):
    B, H, L, d = x.shape
    return jnp.transpose(x, (0, 2, 1, 3)).reshape(B, L, H * d)


def reference_forward(torch_params, pre_qs, pre_ks, pre_vs, k_mask, num_heads, d_qk):
    p = torch_params
    qs = _split_heads(pre_qs @ p["wq"].T + p["bq"], num_heads)
    ks = _split_heads(pre_ks @ p["wk"].T + p["bk"], num_heads)
    vs = _split_heads(pre_vs @ p["wv"].T + p["bv"], num_heads)
    logits = jnp.einsum("bhqd,bhkd->bhqk", qs, ks) / math.sqrt(d_qk)
    logits = jnp.where(k_mask[:, None, None, :], logits, -jnp.inf)
    probs = jax.nn.softmax(logits, axis=-1)
    return _join_heads(jnp.einsum("bhqk,bhkd->bhqd", probs, vs))


# ---------------------------------------------------------------------------
if __name__ == "__main__":
    # Module hyper-parameters (small, consistent with the forward pass).
    d_pre_q, d_pre_k, d_pre_v = 16, 16, 16
    d_qk, d_v, num_heads = 8, 8, 2
    B, Lq, Lk = 2, 8, 8

    key = jax.random.PRNGKey(0)
    ks_ = jax.random.split(key, 10)

    # Deterministic parameter init (PyTorch Linear layout: weight (out, in)).
    torch_params = {
        "wq": 0.1 * jax.random.normal(ks_[0], (num_heads * d_qk, d_pre_q), jnp.float32),
        "bq": 0.1 * jax.random.normal(ks_[1], (num_heads * d_qk,), jnp.float32),
        "wk": 0.1 * jax.random.normal(ks_[2], (num_heads * d_qk, d_pre_k), jnp.float32),
        "bk": 0.1 * jax.random.normal(ks_[3], (num_heads * d_qk,), jnp.float32),
        "wv": 0.1 * jax.random.normal(ks_[4], (num_heads * d_v, d_pre_v), jnp.float32),
        "bv": 0.1 * jax.random.normal(ks_[5], (num_heads * d_v,), jnp.float32),
    }
    params = prepare_params(torch_params)   # one-time transpose/reshape

    pre_qs = jax.random.normal(ks_[6], (B, Lq, d_pre_q), jnp.float32)
    pre_ks = jax.random.normal(ks_[7], (B, Lk, d_pre_k), jnp.float32)
    pre_vs = jax.random.normal(ks_[8], (B, Lk, d_pre_v), jnp.float32)
    # key mask: last two key positions of batch 1 are masked out
    k_mask = jnp.ones((B, Lk), dtype=bool).at[1, Lk - 2:].set(False)

    out = attention_seq_to_masked_forward(
        params, pre_qs, pre_ks, pre_vs, k_mask, num_heads, d_qk, d_v
    )
    out = jax.block_until_ready(out)

    ref = reference_forward(torch_params, pre_qs, pre_ks, pre_vs, k_mask,
                            num_heads, d_qk)
    assert out.shape == (B, Lq, num_heads * d_v)
    assert jnp.allclose(out, ref, rtol=2e-2, atol=2e-2), (
        f"max abs err {jnp.max(jnp.abs(out - ref))}")

    print("KERNEL_OK")
</pallas_src>

<mosaic_0001>
module attributes {stable_mosaic.version = 11 : i64} {
  func.func @_fused_attn_kernel(%arg0: i32, %arg1: memref<1x8x16xf32, #tpu.memory_space<vmem>>, %arg2: memref<1x8x16xf32, #tpu.memory_space<vmem>>, %arg3: memref<1x8x16xf32, #tpu.memory_space<vmem>>, %arg4: memref<1x1x8xi32, #tpu.memory_space<vmem>>, %arg5: memref<16x16xf32, #tpu.memory_space<vmem>>, %arg6: memref<1x16xf32, #tpu.memory_space<vmem>>, %arg7: memref<16x16xf32, #tpu.memory_space<vmem>>, %arg8: memref<1x16xf32, #tpu.memory_space<vmem>>, %arg9: memref<16x16xf32, #tpu.memory_space<vmem>>, %arg10: memref<1x16xf32, #tpu.memory_space<vmem>>, %arg11: memref<1x8x16xf32, #tpu.memory_space<vmem>>) attributes {dimension_semantics = [#tpu.dimension_semantics<parallel>], iteration_bounds = array<i64: 2>, scalar_prefetch = 0 : i64, scratch_operands = 0 : i64, tpu.core_type = #tpu.core_type<tc>, window_params = [{transform_indices = @transform_0, window_bounds = array<i64: 1, 8, 16>}, {transform_indices = @transform_1, window_bounds = array<i64: 1, 8, 16>}, {transform_indices = @transform_2, window_bounds = array<i64: 1, 8, 16>}, {transform_indices = @transform_3, window_bounds = array<i64: 1, 1, 8>}, {pipeline_mode = #tpu.pipeline_mode<synchronous>, transform_indices = @transform_4, window_bounds = array<i64: 16, 16>}, {pipeline_mode = #tpu.pipeline_mode<synchronous>, transform_indices = @transform_5, window_bounds = array<i64: 1, 16>}, {pipeline_mode = #tpu.pipeline_mode<synchronous>, transform_indices = @transform_6, window_bounds = array<i64: 16, 16>}, {pipeline_mode = #tpu.pipeline_mode<synchronous>, transform_indices = @transform_7, window_bounds = array<i64: 1, 16>}, {pipeline_mode = #tpu.pipeline_mode<synchronous>, transform_indices = @transform_8, window_bounds = array<i64: 16, 16>}, {pipeline_mode = #tpu.pipeline_mode<synchronous>, transform_indices = @transform_9, window_bounds = array<i64: 1, 16>}, {transform_indices = @transform_10, window_bounds = array<i64: 1, 8, 16>}]} {
    %c0 = arith.constant 0 : index
    %c0_0 = arith.constant 0 : index
    %c0_1 = arith.constant 0 : index
    %0 = vector.load %arg1[%c0, %c0_0, %c0_1] : memref<1x8x16xf32, #tpu.memory_space<vmem>>, vector<1x8x16xf32>
    %1 = vector.shape_cast %0 : vector<1x8x16xf32> to vector<8x16xf32>
    %c0_2 = arith.constant 0 : index
    %c0_3 = arith.constant 0 : index
    %c0_4 = arith.constant 0 : index
    %2 = vector.load %arg2[%c0_2, %c0_3, %c0_4] : memref<1x8x16xf32, #tpu.memory_space<vmem>>, vector<1x8x16xf32>
    %3 = vector.shape_cast %2 : vector<1x8x16xf32> to vector<8x16xf32>
    %c0_5 = arith.constant 0 : index
    %c0_6 = arith.constant 0 : index
    %c0_7 = arith.constant 0 : index
    %4 = vector.load %arg3[%c0_5, %c0_6, %c0_7] : memref<1x8x16xf32, #tpu.memory_space<vmem>>, vector<1x8x16xf32>
    %5 = vector.shape_cast %4 : vector<1x8x16xf32> to vector<8x16xf32>
    %c0_8 = arith.constant 0 : index
    %c0_9 = arith.constant 0 : index
    %c0_10 = arith.constant 0 : index
    %6 = vector.load %arg4[%c0_8, %c0_9, %c0_10] : memref<1x1x8xi32, #tpu.memory_space<vmem>>, vector<1x1x8xi32>
    %7 = vector.shape_cast %6 : vector<1x1x8xi32> to vector<1x8xi32>
    %c0_i32 = arith.constant 0 : i32
    %8 = vector.broadcast %c0_i32 : i32 to vector<1x8xi32>
    %9 = arith.cmpi ne, %7, %8 : vector<1x8xi32>
    %c0_11 = arith.constant 0 : index
    %c0_12 = arith.constant 0 : index
    %10 = vector.load %arg5[%c0_11, %c0_12] : memref<16x16xf32, #tpu.memory_space<vmem>>, vector<16x16xf32>
    %cst = arith.constant dense<0.000000e+00> : vector<8x16xf32>
    %11 = tpu.matmul %1, %10, %cst {dimension_numbers = #tpu.dot_dimension_numbers<[1], [0], [0], [1], [0, 0, 1, 1], [], []>} : vector<8x16xf32>, vector<16x16xf32>, vector<8x16xf32> -> vector<8x16xf32>
    %c0_13 = arith.constant 0 : index
    %c0_14 = arith.constant 0 : index
    %12 = vector.load %arg6[%c0_13, %c0_14] : memref<1x16xf32, #tpu.memory_space<vmem>>, vector<1x16xf32>
    %13 = vector.broadcast %12 : vector<1x16xf32> to vector<8x16xf32>
    %14 = arith.addf %11, %13 : vector<8x16xf32>
    %c0_15 = arith.constant 0 : index
    %c0_16 = arith.constant 0 : index
    %15 = vector.load %arg7[%c0_15, %c0_16] : memref<16x16xf32, #tpu.memory_space<vmem>>, vector<16x16xf32>
    %cst_17 = arith.constant dense<0.000000e+00> : vector<8x16xf32>
    %16 = tpu.matmul %3, %15, %cst_17 {dimension_numbers = #tpu.dot_dimension_numbers<[1], [0], [0], [1], [0, 0, 1, 1], [], []>} : vector<8x16xf32>, vector<16x16xf32>, vector<8x16xf32> -> vector<8x16xf32>
    %c0_18 = arith.constant 0 : index
    %c0_19 = arith.constant 0 : index
    %17 = vector.load %arg8[%c0_18, %c0_19] : memref<1x16xf32, #tpu.memory_space<vmem>>, vector<1x16xf32>
    %18 = vector.broadcast %17 : vector<1x16xf32> to vector<8x16xf32>
    %19 = arith.addf %16, %18 : vector<8x16xf32>
    %c0_20 = arith.constant 0 : index
    %c0_21 = arith.constant 0 : index
    %20 = vector.load %arg9[%c0_20, %c0_21] : memref<16x16xf32, #tpu.memory_space<vmem>>, vector<16x16xf32>
    %cst_22 = arith.constant dense<0.000000e+00> : vector<8x16xf32>
    %21 = tpu.matmul %5, %20, %cst_22 {dimension_numbers = #tpu.dot_dimension_numbers<[1], [0], [0], [1], [0, 0, 1, 1], [], []>} : vector<8x16xf32>, vector<16x16xf32>, vector<8x16xf32> -> vector<8x16xf32>
    %c0_23 = arith.constant 0 : index
    %c0_24 = arith.constant 0 : index
    %22 = vector.load %arg10[%c0_23, %c0_24] : memref<1x16xf32, #tpu.memory_space<vmem>>, vector<1x16xf32>
    %23 = vector.broadcast %22 : vector<1x16xf32> to vector<8x16xf32>
    %24 = arith.addf %21, %23 : vector<8x16xf32>
    %cst_25 = arith.constant 0.353553385 : f32
    %25 = vector.broadcast %cst_25 : f32 to vector<8x16xf32>
    %26 = arith.mulf %14, %25 : vector<8x16xf32>
    %27 = arith.truncf %26 : vector<8x16xf32> to vector<8x16xbf16>
    %28 = arith.truncf %19 : vector<8x16xf32> to vector<8x16xbf16>
    %29 = arith.truncf %24 : vector<8x16xf32> to vector<8x16xbf16>
    %30 = vector.extract_strided_slice %27 {offsets = [0, 0], sizes = [8, 8], strides = [1, 1]} : vector<8x16xbf16> to vector<8x8xbf16>
    %31 = vector.extract_strided_slice %28 {offsets = [0, 0], sizes = [8, 8], strides = [1, 1]} : vector<8x16xbf16> to vector<8x8xbf16>
    %32 = vector.extract_strided_slice %29 {offsets = [0, 0], sizes = [8, 8], strides = [1, 1]} : vector<8x16xbf16> to vector<8x8xbf16>
    %cst_26 = arith.constant dense<0.000000e+00> : vector<8x8xf32>
    %33 = tpu.matmul %30, %31, %cst_26 {dimension_numbers = #tpu.dot_dimension_numbers<[1], [1], [0], [0], [0, 0, 1, 0], [], []>} : vector<8x8xbf16>, vector<8x8xbf16>, vector<8x8xf32> -> vector<8x8xf32>
    %cst_27 = arith.constant 0xFF800000 : f32
    %34 = vector.shape_cast %9 : vector<1x8xi1> to vector<1x8xi1>
    %35 = vector.broadcast %34 : vector<1x8xi1> to vector<8x8xi1>
    %36 = vector.broadcast %cst_27 : f32 to vector<8x8xf32>
    %37 = arith.select %35, %33, %36 : vector<8x8xi1>, vector<8x8xf32>
    %cst_28 = arith.constant dense<0xFF800000> : vector<8xf32>
    %38 = vector.multi_reduction <maximumf>, %37, %cst_28 [1] : vector<8x8xf32> to vector<8xf32>
    %39 = vector.shape_cast %38 : vector<8xf32> to vector<8x1xf32>
    %40 = vector.broadcast %39 : vector<8x1xf32> to vector<8x8xf32>
    %41 = arith.subf %37, %40 : vector<8x8xf32>
    %42 = math.exp %41 : vector<8x8xf32>
    %cst_29 = arith.constant dense<0.000000e+00> : vector<8xf32>
    %43 = vector.multi_reduction <add>, %42, %cst_29 [1] : vector<8x8xf32> to vector<8xf32>
    %44 = vector.shape_cast %43 : vector<8xf32> to vector<8x1xf32>
    %45 = tpu.reciprocal %44 {approx = true} : vector<8x1xf32> -> vector<8x1xf32>
    %46 = vector.broadcast %45 : vector<8x1xf32> to vector<8x8xf32>
    %47 = arith.mulf %42, %46 : vector<8x8xf32>
    %48 = arith.truncf %47 : vector<8x8xf32> to vector<8x8xbf16>
    %cst_30 = arith.constant dense<0.000000e+00> : vector<8x8xf32>
    %49 = tpu.matmul %48, %32, %cst_30 {dimension_numbers = #tpu.dot_dimension_numbers<[1], [0], [0], [1], [0, 0, 1, 1], [], []>} : vector<8x8xbf16>, vector<8x8xbf16>, vector<8x8xf32> -> vector<8x8xf32>
    %50 = vector.extract_strided_slice %27 {offsets = [0, 8], sizes = [8, 8], strides = [1, 1]} : vector<8x16xbf16> to vector<8x8xbf16>
    %51 = vector.extract_strided_slice %28 {offsets = [0, 8], sizes = [8, 8], strides = [1, 1]} : vector<8x16xbf16> to vector<8x8xbf16>
    %52 = vector.extract_strided_slice %29 {offsets = [0, 8], sizes = [8, 8], strides = [1, 1]} : vector<8x16xbf16> to vector<8x8xbf16>
    %cst_31 = arith.constant dense<0.000000e+00> : vector<8x8xf32>
    %53 = tpu.matmul %50, %51, %cst_31 {dimension_numbers = #tpu.dot_dimension_numbers<[1], [1], [0], [0], [0, 0, 1, 0], [], []>} : vector<8x8xbf16>, vector<8x8xbf16>, vector<8x8xf32> -> vector<8x8xf32>
    %cst_32 = arith.constant 0xFF800000 : f32
    %54 = vector.shape_cast %9 : vector<1x8xi1> to vector<1x8xi1>
    %55 = vector.broadcast %54 : vector<1x8xi1> to vector<8x8xi1>
    %56 = vector.broadcast %cst_32 : f32 to vector<8x8xf32>
    %57 = arith.select %55, %53, %56 : vector<8x8xi1>, vector<8x8xf32>
    %cst_33 = arith.constant dense<0xFF800000> : vector<8xf32>
    %58 = vector.multi_reduction <maximumf>, %57, %cst_33 [1] : vector<8x8xf32> to vector<8xf32>
    %59 = vector.shape_cast %58 : vector<8xf32> to vector<8x1xf32>
    %60 = vector.broadcast %59 : vector<8x1xf32> to vector<8x8xf32>
    %61 = arith.subf %57, %60 : vector<8x8xf32>
    %62 = math.exp %61 : vector<8x8xf32>
    %cst_34 = arith.constant dense<0.000000e+00> : vector<8xf32>
    %63 = vector.multi_reduction <add>, %62, %cst_34 [1] : vector<8x8xf32> to vector<8xf32>
    %64 = vector.shape_cast %63 : vector<8xf32> to vector<8x1xf32>
    %65 = tpu.reciprocal %64 {approx = true} : vector<8x1xf32> -> vector<8x1xf32>
    %66 = vector.broadcast %65 : vector<8x1xf32> to vector<8x8xf32>
    %67 = arith.mulf %62, %66 : vector<8x8xf32>
    %68 = arith.truncf %67 : vector<8x8xf32> to vector<8x8xbf16>
    %cst_35 = arith.constant dense<0.000000e+00> : vector<8x8xf32>
    %69 = tpu.matmul %68, %52, %cst_35 {dimension_numbers = #tpu.dot_dimension_numbers<[1], [0], [0], [1], [0, 0, 1, 1], [], []>} : vector<8x8xbf16>, vector<8x8xbf16>, vector<8x8xf32> -> vector<8x8xf32>
    %70 = tpu.concatenate %49, %69 in 1 : vector<8x8xf32>, vector<8x8xf32> -> vector<8x16xf32>
    %c0_36 = arith.constant 0 : index
    %c0_37 = arith.constant 0 : index
    %c0_38 = arith.constant 0 : index
    %71 = vector.load %arg11[%c0_36, %c0_37, %c0_38] : memref<1x8x16xf32, #tpu.memory_space<vmem>>, vector<1x8x16xf32>
    %72 = vector.shape_cast %71 : vector<1x8x16xf32> to vector<8x16xf32>
    %73 = vector.shape_cast %70 : vector<8x16xf32> to vector<1x8x16xf32>
    tpu.vector_store %arg11[%c0_36, %c0_37, %c0_38], %73 {strides = array<i32>} : memref<1x8x16xf32, #tpu.memory_space<vmem>>, vector<1x8x16xf32>,
    return
  }
  func.func @transform_0(%arg0: i32) -> (i32, i32, i32) {
    %c0_i32 = arith.constant 0 : i32
    %c0_i32_0 = arith.constant 0 : i32
    %c0_i32_1 = arith.constant 0 : i32
    return %arg0, %c0_i32, %c0_i32_0 : i32, i32, i32
  }
  func.func @transform_1(%arg0: i32) -> (i32, i32, i32) {
    %c0_i32 = arith.constant 0 : i32
    %c0_i32_0 = arith.constant 0 : i32
    %c0_i32_1 = arith.constant 0 : i32
    return %arg0, %c0_i32, %c0_i32_0 : i32, i32, i32
  }
  func.func @transform_2(%arg0: i32) -> (i32, i32, i32) {
    %c0_i32 = arith.constant 0 : i32
    %c0_i32_0 = arith.constant 0 : i32
    %c0_i32_1 = arith.constant 0 : i32
    return %arg0, %c0_i32, %c0_i32_0 : i32, i32, i32
  }
  func.func @transform_3(%arg0: i32) -> (i32, i32, i32) {
    %c0_i32 = arith.constant 0 : i32
    %c0_i32_0 = arith.constant 0 : i32
    %c0_i32_1 = arith.constant 0 : i32
    return %arg0, %c0_i32, %c0_i32_0 : i32, i32, i32
  }
  func.func @transform_4(%arg0: i32) -> (i32, i32) {
    %c0_i32 = arith.constant 0 : i32
    %c0_i32_0 = arith.constant 0 : i32
    %c0_i32_1 = arith.constant 0 : i32
    return %c0_i32, %c0_i32_0 : i32, i32
  }
  func.func @transform_5(%arg0: i32) -> (i32, i32) {
    %c0_i32 = arith.constant 0 : i32
    %c0_i32_0 = arith.constant 0 : i32
    %c0_i32_1 = arith.constant 0 : i32
    return %c0_i32, %c0_i32_0 : i32, i32
  }
  func.func @transform_6(%arg0: i32) -> (i32, i32) {
    %c0_i32 = arith.constant 0 : i32
    %c0_i32_0 = arith.constant 0 : i32
    %c0_i32_1 = arith.constant 0 : i32
    return %c0_i32, %c0_i32_0 : i32, i32
  }
  func.func @transform_7(%arg0: i32) -> (i32, i32) {
    %c0_i32 = arith.constant 0 : i32
    %c0_i32_0 = arith.constant 0 : i32
    %c0_i32_1 = arith.constant 0 : i32
    return %c0_i32, %c0_i32_0 : i32, i32
  }
  func.func @transform_8(%arg0: i32) -> (i32, i32) {
    %c0_i32 = arith.constant 0 : i32
    %c0_i32_0 = arith.constant 0 : i32
    %c0_i32_1 = arith.constant 0 : i32
    return %c0_i32, %c0_i32_0 : i32, i32
  }
  func.func @transform_9(%arg0: i32) -> (i32, i32) {
    %c0_i32 = arith.constant 0 : i32
    %c0_i32_0 = arith.constant 0 : i32
    %c0_i32_1 = arith.constant 0 : i32
    return %c0_i32, %c0_i32_0 : i32, i32
  }
  func.func @transform_10(%arg0: i32) -> (i32, i32, i32) {
    %c0_i32 = arith.constant 0 : i32
    %c0_i32_0 = arith.constant 0 : i32
    %c0_i32_1 = arith.constant 0 : i32
    return %arg0, %c0_i32, %c0_i32_0 : i32, i32, i32
  }
}

</mosaic_0001>

<llo_original>
// kernel: tpu_custom_call.1
$region0: #{tpu_custom_call.1}
  #allocation0 [shape = 'u32[]', space=smem, size = 0x4, offset = 0x4, fixed_abs, tag = 'smem constant byte address 0x4 - core index']
  #allocation1 [shape = 'u32[72,128]{1,0:T(1,128)}', space=vmem, size = 0x9000, scoped, tag = 'internal scratch']
  %s0 = inlined_call_operand.hbm [shape: f32[2,8,16], index: 0, kind: input, shape index: {}]
  %s1 = inlined_call_operand.hbm [shape: f32[2,8,16], index: 1, kind: input, shape index: {}]
  %s2 = inlined_call_operand.hbm [shape: f32[2,8,16], index: 2, kind: input, shape index: {}]
  %s3 = inlined_call_operand.vmem [shape: s32[2,1,8], index: 3, kind: input, shape index: {}]
  %s4 = inlined_call_operand.hbm [shape: f32[16,16], index: 4, kind: input, shape index: {}]
  %s5 = inlined_call_operand.vmem [shape: f32[1,16], index: 5, kind: input, shape index: {}]
  %s6 = inlined_call_operand.hbm [shape: f32[16,16], index: 6, kind: input, shape index: {}]
  %s7 = inlined_call_operand.vmem [shape: f32[1,16], index: 7, kind: input, shape index: {}]
  %s8 = inlined_call_operand.hbm [shape: f32[16,16], index: 8, kind: input, shape index: {}]
  %s9 = inlined_call_operand.vmem [shape: f32[1,16], index: 9, kind: input, shape index: {}]
  %s10 = inlined_call_operand.hbm [shape: f32[2,8,16], index: 10, kind: output, shape index: {}]
  %s11 = sld [smem:[#allocation0]]
  $region97: #{tpu_custom_call.1} parent=0
    _
  %s13 = ssub.s32 1, %s11
  %s14 = scalar_select 0, %s13, %s11
  $region1: #{tpu_custom_call.1} parent=0
    #allocation2 [shape = 'u8[8192]{0}', space=vmem, size = 0x2000, scoped, tag = 'input window, operand 0']
    #allocation3 [shape = 's32[2]{0}', space=sflag, size = 0x8, scoped, tag = 'scoped memory for tpu_custom_call.1']
    #allocation4 [shape = 's32[2]{0}', space=sflag, size = 0x8, scoped, tag = 'scoped memory for tpu_custom_call.1']
    #allocation5 [shape = 'u8[8192]{0}', space=vmem, size = 0x2000, scoped, tag = 'input window, operand 1']
    #allocation6 [shape = 's32[2]{0}', space=sflag, size = 0x8, scoped, tag = 'scoped memory for tpu_custom_call.1']
    #allocation7 [shape = 'u8[8192]{0}', space=vmem, size = 0x2000, scoped, tag = 'input window, operand 2']
    #allocation8 [shape = 'u8[8192]{0}', space=vmem, size = 0x2000, scoped, tag = 'input window, operand 4, single buffered']
    #allocation9 [shape = 's32[1]{0}', space=sflag, size = 0x4, scoped, tag = 'scoped memory for tpu_custom_call.1']
    #allocation10 [shape = 'u8[8192]{0}', space=vmem, size = 0x2000, scoped, tag = 'input window, operand 6, single buffered']
    #allocation11 [shape = 'u8[8192]{0}', space=vmem, size = 0x2000, scoped, tag = 'input window, operand 8, single buffered']
    #allocation12 [shape = 's32[1]{0}', space=sflag, size = 0x4, scoped, tag = 'scoped memory for tpu_custom_call.1']
    #allocation13 [shape = 'u8[8192]{0}', space=vmem, size = 0x2000, scoped, tag = 'output window, operand 0']
    %15 = vsyncpa [#allocation3], 0
    %s16 = scalar_lea.sflag [#allocation3], 1
    %17 = vsyncpa %s16, 0
    %18 = vsyncpa [#allocation6], 0
    %s19 = scalar_lea.sflag [#allocation6], 1
    %20 = vsyncpa %s19, 0
    %21 = vsyncpa [#allocation9], 0
    %22 = vsyncpa [#allocation12], 0
    %23 = vsyncpa [#allocation4], 0
    %s24 = scalar_lea.sflag [#allocation4], 1
    %25 = vsyncpa %s24, 0
    loop: start=0, step=1, limit=4
    $region2: #{tpu_custom_call.1} parent=1 // loop_pre_header
      _
    $region3: #{tpu_custom_call.1} parent=1 // loop_header
      %s27 = sphi 0, %s31
      %p28 = scmp.ge.s32.totalorder %s27, 4
      %s37 = sphi 0, %s39
      %s40 = sphi 0, %s37
      %s41 = sphi 0, %s40
      %s57 = sphi 0, %s41
      %s63 = sphi 0, %s65
      %s66 = sphi 0, %s63
      %s67 = sphi 0, %s66
      %s83 = sphi 0, %s67
      %s89 = sphi 0, %s91
      %s92 = sphi 0, %s89
      %s93 = sphi 0, %s92
      %s109 = sphi 0, %s93
      %s115 = sphi 0, %s117
      %s118 = sphi 0, %s115
      %s119 = sphi 0, %s118
      %s135 = sphi 0, %s119
      %s139 = sphi 0, %s139
      %s141 = sphi 0, %s139
      %s142 = sphi 0, %s141
      %s156 = sphi 0, %s142
      %s160 = sphi 0, %s160
      %s162 = sphi 0, %s160
      %s163 = sphi 0, %s162
      %s177 = sphi 0, %s163
      %s181 = sphi 0, %s181
      %s183 = sphi 0, %s181
      %s184 = sphi 0, %s183
      %s198 = sphi 0, %s184
      %s202 = sphi 0, %s202
      %s204 = sphi 0, %s202
      %s205 = sphi 0, %s204
      %s219 = sphi 0, %s205
      %s223 = sphi 0, %s223
      %s225 = sphi 0, %s223
      %s226 = sphi 0, %s225
      %s240 = sphi 0, %s226
      %s244 = sphi 0, %s244
      %s246 = sphi 0, %s244
      %s247 = sphi 0, %s246
      %s261 = sphi 0, %s247
      %s267 = sphi 0, %s269
      %s270 = sphi 0, %s267
      %s271 = sphi 0, %s270
      %s287 = sphi 0, %s271
    $region4: #{tpu_custom_call.1} parent=1 // loop_header_branch
      %30 = sbr.rel (%p28) target = $region8
    $region5: #{tpu_custom_call.1} parent=1 // loop_body
      %s32 = ssub.s32 %s27, 1
      %s33 = ssub.s32 %s27, 2
      %s34 = sadd.s32 %s27, 1
      %s35 = ssub.s32 %s27, %s34
      %p36 = scmp.eq.s32.totalorder %s35, 0
      %s38 = sadd.s32 %s37, 1
      %s39 = scalar_select %p36, %s37, %s38
      %p42 = pneg %p36
      %p43 = scmp.eq.s32.totalorder %s27, 1
      %p44 = por %p42, %p43
      %p45 = scmp.ne.s32.totalorder %s37, %s40
      %p46 = scmp.eq.s32.totalorder %s27, 0
      %p47 = por %p45, %p46
      %p48 = scmp.ne.s32.totalorder %s37, %s40
      %p49 = scmp.eq.s32.totalorder %s32, 1
      %p50 = por %p48, %p49
      %p51 = scmp.ne.s32.totalorder %s40, %s41
      %p52 = scmp.eq.s32.totalorder %s32, 0
      %p53 = por %p51, %p52
      %p54 = scmp.ne.s32.totalorder %s40, %s41
      %p55 = scmp.eq.s32.totalorder %s33, 1
      %p56 = por %p54, %p55
      %p58 = scmp.ne.s32.totalorder %s41, %s57
      %p59 = scmp.eq.s32.totalorder %s33, 0
      %p60 = por %p58, %p59
      %s61 = ssub.s32 %s27, %s34
      %p62 = scmp.eq.s32.totalorder %s61, 0
      %s64 = sadd.s32 %s63, 1
      %s65 = scalar_select %p62, %s63, %s64
      %p68 = pneg %p62
      %p69 = scmp.eq.s32.totalorder %s27, 1
      %p70 = por %p68, %p69
      %p71 = scmp.ne.s32.totalorder %s63, %s66
      %p72 = scmp.eq.s32.totalorder %s27, 0
      %p73 = por %p71, %p72
      %p74 = scmp.ne.s32.totalorder %s63, %s66
      %p75 = scmp.eq.s32.totalorder %s32, 1
      %p76 = por %p74, %p75
      %p77 = scmp.ne.s32.totalorder %s66, %s67
      %p78 = scmp.eq.s32.totalorder %s32, 0
      %p79 = por %p77, %p78
      %p80 = scmp.ne.s32.totalorder %s66, %s67
      %p81 = scmp.eq.s32.totalorder %s33, 1
      %p82 = por %p80, %p81
      %p84 = scmp.ne.s32.totalorder %s67, %s83
      %p85 = scmp.eq.s32.totalorder %s33, 0
      %p86 = por %p84, %p85
      %s87 = ssub.s32 %s27, %s34
      %p88 = scmp.eq.s32.totalorder %s87, 0
      %s90 = sadd.s32 %s89, 1
      %s91 = scalar_select %p88, %s89, %s90
      %p94 = pneg %p88
      %p95 = scmp.eq.s32.totalorder %s27, 1
      %p96 = por %p94, %p95
      %p97 = scmp.ne.s32.totalorder %s89, %s92
      %p98 = scmp.eq.s32.totalorder %s27, 0
      %p99 = por %p97, %p98
      %p100 = scmp.ne.s32.totalorder %s89, %s92
      %p101 = scmp.eq.s32.totalorder %s32, 1
      %p102 = por %p100, %p101
      %p103 = scmp.ne.s32.totalorder %s92, %s93
      %p104 = scmp.eq.s32.totalorder %s32, 0
      %p105 = por %p103, %p104
      %p106 = scmp.ne.s32.totalorder %s92, %s93
      %p107 = scmp.eq.s32.totalorder %s33, 1
      %p108 = por %p106, %p107
      %p110 = scmp.ne.s32.totalorder %s93, %s109
      %p111 = scmp.eq.s32.totalorder %s33, 0
      %p112 = por %p110, %p111
      %s113 = ssub.s32 %s27, %s34
      %p114 = scmp.eq.s32.totalorder %s113, 0
      %s116 = sadd.s32 %s115, 1
      %s117 = scalar_select %p114, %s115, %s116
      %p120 = pneg %p114
      %p121 = scmp.eq.s32.totalorder %s27, 1
      %p122 = por %p120, %p121
      %p123 = scmp.ne.s32.totalorder %s115, %s118
      %p124 = scmp.eq.s32.totalorder %s27, 0
      %p125 = por %p123, %p124
      %p126 = scmp.ne.s32.totalorder %s115, %s118
      %p127 = scmp.eq.s32.totalorder %s32, 1
      %p128 = por %p126, %p127
      %p129 = scmp.ne.s32.totalorder %s118, %s119
      %p130 = scmp.eq.s32.totalorder %s32, 0
      %p131 = por %p129, %p130
      %p132 = scmp.ne.s32.totalorder %s118, %s119
      %p133 = scmp.eq.s32.totalorder %s33, 1
      %p134 = por %p132, %p133
      %p136 = scmp.ne.s32.totalorder %s119, %s135
      %p137 = scmp.eq.s32.totalorder %s33, 0
      %p138 = por %p136, %p137
      %s140 = sadd.s32 %s139, 1
      %p143 = scmp.eq.s32.totalorder %s27, 1
      %p144 = scmp.ne.s32.totalorder %s139, %s141
      %p145 = scmp.eq.s32.totalorder %s27, 0
      %p146 = por %p144, %p145
      %p147 = scmp.ne.s32.totalorder %s139, %s141
      %p148 = scmp.eq.s32.totalorder %s32, 1
      %p149 = por %p147, %p148
      %p150 = scmp.ne.s32.totalorder %s141, %s142
      %p151 = scmp.eq.s32.totalorder %s32, 0
      %p152 = por %p150, %p151
      %p153 = scmp.ne.s32.totalorder %s141, %s142
      %p154 = scmp.eq.s32.totalorder %s33, 1
      %p155 = por %p153, %p154
      %p157 = scmp.ne.s32.totalorder %s142, %s156
      %p158 = scmp.eq.s32.totalorder %s33, 0
      %p159 = por %p157, %p158
      %s161 = sadd.s32 %s160, 1
      %p164 = scmp.eq.s32.totalorder %s27, 1
      %p165 = scmp.ne.s32.totalorder %s160, %s162
      %p166 = scmp.eq.s32.totalorder %s27, 0
      %p167 = por %p165, %p166
      %p168 = scmp.ne.s32.totalorder %s160, %s162
      %p169 = scmp.eq.s32.totalorder %s32, 1
      %p170 = por %p168, %p169
      %p171 = scmp.ne.s32.totalorder %s162, %s163
      %p172 = scmp.eq.s32.totalorder %s32, 0
      %p173 = por %p171, %p172
      %p174 = scmp.ne.s32.totalorder %s162, %s163
      %p175 = scmp.eq.s32.totalorder %s33, 1
      %p176 = por %p174, %p175
      %p178 = scmp.ne.s32.totalorder %s163, %s177
      %p179 = scmp.eq.s32.totalorder %s33, 0
      %p180 = por %p178, %p179
      %s182 = sadd.s32 %s181, 1
      %p185 = scmp.eq.s32.totalorder %s27, 1
      %p186 = scmp.ne.s32.totalorder %s181, %s183
      %p187 = scmp.eq.s32.totalorder %s27, 0
      %p188 = por %p186, %p187
      %p189 = scmp.ne.s32.totalorder %s181, %s183
      %p190 = scmp.eq.s32.totalorder %s32, 1
      %p191 = por %p189, %p190
      %p192 = scmp.ne.s32.totalorder %s183, %s184
      %p193 = scmp.eq.s32.totalorder %s32, 0
      %p194 = por %p192, %p193
      %p195 = scmp.ne.s32.totalorder %s183, %s184
      %p196 = scmp.eq.s32.totalorder %s33, 1
      %p197 = por %p195, %p196
      %p199 = scmp.ne.s32.totalorder %s184, %s198
      %p200 = scmp.eq.s32.totalorder %s33, 0
      %p201 = por %p199, %p200
      %s203 = sadd.s32 %s202, 1
      %p206 = scmp.eq.s32.totalorder %s27, 1
      %p207 = scmp.ne.s32.totalorder %s202, %s204
      %p208 = scmp.eq.s32.totalorder %s27, 0
      %p209 = por %p207, %p208
      %p210 = scmp.ne.s32.totalorder %s202, %s204
      %p211 = scmp.eq.s32.totalorder %s32, 1
      %p212 = por %p210, %p211
      %p213 = scmp.ne.s32.totalorder %s204, %s205
      %p214 = scmp.eq.s32.totalorder %s32, 0
      %p215 = por %p213, %p214
      %p216 = scmp.ne.s32.totalorder %s204, %s205
      %p217 = scmp.eq.s32.totalorder %s33, 1
      %p218 = por %p216, %p217
      %p220 = scmp.ne.s32.totalorder %s205, %s219
      %p221 = scmp.eq.s32.totalorder %s33, 0
      %p222 = por %p220, %p221
      %s224 = sadd.s32 %s223, 1
      %p227 = scmp.eq.s32.totalorder %s27, 1
      %p228 = scmp.ne.s32.totalorder %s223, %s225
      %p229 = scmp.eq.s32.totalorder %s27, 0
      %p230 = por %p228, %p229
      %p231 = scmp.ne.s32.totalorder %s223, %s225
      %p232 = scmp.eq.s32.totalorder %s32, 1
      %p233 = por %p231, %p232
      %p234 = scmp.ne.s32.totalorder %s225, %s226
      %p235 = scmp.eq.s32.totalorder %s32, 0
      %p236 = por %p234, %p235
      %p237 = scmp.ne.s32.totalorder %s225, %s226
      %p238 = scmp.eq.s32.totalorder %s33, 1
      %p239 = por %p237, %p238
      %p241 = scmp.ne.s32.totalorder %s226, %s240
      %p242 = scmp.eq.s32.totalorder %s33, 0
      %p243 = por %p241, %p242
      %s245 = sadd.s32 %s244, 1
      %p248 = scmp.eq.s32.totalorder %s27, 1
      %p249 = scmp.ne.s32.totalorder %s244, %s246
      %p250 = scmp.eq.s32.totalorder %s27, 0
      %p251 = por %p249, %p250
      %p252 = scmp.ne.s32.totalorder %s244, %s246
      %p253 = scmp.eq.s32.totalorder %s32, 1
      %p254 = por %p252, %p253
      %p255 = scmp.ne.s32.totalorder %s246, %s247
      %p256 = scmp.eq.s32.totalorder %s32, 0
      %p257 = por %p255, %p256
      %p258 = scmp.ne.s32.totalorder %s246, %s247
      %p259 = scmp.eq.s32.totalorder %s33, 1
      %p260 = por %p258, %p259
      %p262 = scmp.ne.s32.totalorder %s247, %s261
      %p263 = scmp.eq.s32.totalorder %s33, 0
      %p264 = por %p262, %p263
      %s265 = ssub.s32 %s27, %s34
      %p266 = scmp.eq.s32.totalorder %s265, 0
      %s268 = sadd.s32 %s267, 1
      %s269 = scalar_select %p266, %s267, %s268
      %p272 = pneg %p266
      %p273 = scmp.eq.s32.totalorder %s27, 1
      %p274 = por %p272, %p273
      %p275 = scmp.ne.s32.totalorder %s267, %s270
      %p276 = scmp.eq.s32.totalorder %s27, 0
      %p277 = por %p275, %p276
      %p278 = scmp.ne.s32.totalorder %s267, %s270
      %p279 = scmp.eq.s32.totalorder %s32, 1
      %p280 = por %p278, %p279
      %p281 = scmp.ne.s32.totalorder %s270, %s271
      %p282 = scmp.eq.s32.totalorder %s32, 0
      %p283 = por %p281, %p282
      %p284 = scmp.ne.s32.totalorder %s270, %s271
      %p285 = scmp.eq.s32.totalorder %s33, 1
      %p286 = por %p284, %p285
      %p288 = scmp.ne.s32.totalorder %s271, %s287
      %p289 = scmp.eq.s32.totalorder %s33, 0
      %p290 = por %p288, %p289
      %p291 = scmp.le.s32.totalorder 1, %s27
      %p292 = scmp.lt.s32.totalorder %s27, 3
      %p293 = pnand %p291, %p292
      %p294 = pneg %p293
      // Predicated region
      $region9: #{tpu_custom_call.1} parent=5 // pred_check
        _
      $region10: #{tpu_custom_call.1} parent=5 // pred_check_branch
        %296 = sbr.rel (%p293) target = $region12
      $region11: #{tpu_custom_call.1} parent=5 // pred_region
        %s297 = ssub.s32 %s27, 1
        // Predicated region
        $region13: #{tpu_custom_call.1} parent=11 // pred_check
          %p298 = pneg %p152
        $region14: #{tpu_custom_call.1} parent=11 // pred_check_branch
          %300 = sbr.rel (%p298) target = $region16
        $region15: #{tpu_custom_call.1} parent=11 // pred_region
          %302 = vsyncadd [#allocation9], 0
          %s303 = sshll.u32 %s4, 4
          %s304 = int_to_ptr.hbm [resolvable:$true] %s303
          %s305 = sshll.u32 [#allocation8], 4
          %s306 = int_to_ptr.vmem [resolvable:$true] %s305
          %311 = dma.hbm_to_vmem [thread:$0]  %s304, 256, %s306, [#allocation9], 128, 128, 8
        $region16: #{tpu_custom_call.1} parent=11 // pred_fallthru
          _
        // Predicated region
        $region17: #{tpu_custom_call.1} parent=11 // pred_check
          %p312 = pneg %p173
        $region18: #{tpu_custom_call.1} parent=11 // pred_check_branch
          %314 = sbr.rel (%p312) target = $region20
        $region19: #{tpu_custom_call.1} parent=11 // pred_region
          _
        $region20: #{tpu_custom_call.1} parent=11 // pred_fallthru
          _
        // Predicated region
        $region21: #{tpu_custom_call.1} parent=11 // pred_check
          %p315 = pneg %p194
        $region22: #{tpu_custom_call.1} parent=11 // pred_check_branch
          %317 = sbr.rel (%p315) target = $region24
        $region23: #{tpu_custom_call.1} parent=11 // pred_region
          %319 = vsyncadd [#allocation9], 0
          %s320 = sshll.u32 %s6, 4
          %s321 = int_to_ptr.hbm [resolvable:$true] %s320
          %s322 = sshll.u32 [#allocation10], 4
          %s323 = int_to_ptr.vmem [resolvable:$true] %s322
          %328 = dma.hbm_to_vmem [thread:$0]  %s321, 256, %s323, [#allocation9], 128, 128, 8
        $region24: #{tpu_custom_call.1} parent=11 // pred_fallthru
          _
        // Predicated region
        $region25: #{tpu_custom_call.1} parent=11 // pred_check
          %p329 = pneg %p215
        $region26: #{tpu_custom_call.1} parent=11 // pred_check_branch
          %331 = sbr.rel (%p329) target = $region28
        $region27: #{tpu_custom_call.1} parent=11 // pred_region
          _
        $region28: #{tpu_custom_call.1} parent=11 // pred_fallthru
          _
        // Predicated region
        $region29: #{tpu_custom_call.1} parent=11 // pred_check
          %p332 = pneg %p236
        $region30: #{tpu_custom_call.1} parent=11 // pred_check_branch
          %334 = sbr.rel (%p332) target = $region32
        $region31: #{tpu_custom_call.1} parent=11 // pred_region
          %336 = vsyncadd [#allocation12], 0
          %s337 = sshll.u32 %s8, 4
          %s338 = int_to_ptr.hbm [resolvable:$true] %s337
          %s339 = sshll.u32 [#allocation11], 4
          %s340 = int_to_ptr.vmem [resolvable:$true] %s339
          %345 = dma.hbm_to_vmem [thread:$0]  %s338, 256, %s340, [#allocation12], 128, 128, 8
        $region32: #{tpu_custom_call.1} parent=11 // pred_fallthru
          _
        // Predicated region
        $region33: #{tpu_custom_call.1} parent=11 // pred_check
          %p346 = pneg %p257
        $region34: #{tpu_custom_call.1} parent=11 // pred_check_branch
          %348 = sbr.rel (%p346) target = $region36
        $region35: #{tpu_custom_call.1} parent=11 // pred_region
          _
        $region36: #{tpu_custom_call.1} parent=11 // pred_fallthru
          _
      $region12: #{tpu_custom_call.1} parent=5 // pred_fallthru
        _
      %p349 = scmp.lt.s32.totalorder %s27, 2
      // Predicated region
      $region37: #{tpu_custom_call.1} parent=5 // pred_check
        %p350 = pneg %p349
      $region38: #{tpu_custom_call.1} parent=5 // pred_check_branch
        %352 = sbr.rel (%p350) target = $region40
      $region39: #{tpu_custom_call.1} parent=5 // pred_region
        // Predicated region
        $region41: #{tpu_custom_call.1} parent=39 // pred_check
          %p353 = pneg %p47
        $region42: #{tpu_custom_call.1} parent=39 // pred_check_branch
          %355 = sbr.rel (%p353) target = $region44
        $region43: #{tpu_custom_call.1} parent=39 // pred_region
          %s356 = sand.u32 %s37, 1
          %s357 = scalar_lea.sflag [#allocation3], %s356
          %s358 = sand.u32 %s37, 1
          %s359 = smul.addr %s358, 8
          %s360 = scalar_lea.vmem [#allocation2], %s359
          %362 = vsyncadd %s357, 0
          %s363 = smul.addr %s27, 8
          %s364 = scalar_lea.hbm %s0, %s363
          %s366 = sshll.u32 %s364, 4
          %s367 = int_to_ptr.hbm [resolvable:$true] %s366
          %s368 = sshll.u32 %s360, 4
          %s369 = int_to_ptr.vmem [resolvable:$true] %s368
          %371 = dma.hbm_to_vmem [thread:$0]  %s367, 128, %s369, %s357
        $region44: #{tpu_custom_call.1} parent=39 // pred_fallthru
          _
        // Predicated region
        $region45: #{tpu_custom_call.1} parent=39 // pred_check
          %p372 = pneg %p73
        $region46: #{tpu_custom_call.1} parent=39 // pred_check_branch
          %374 = sbr.rel (%p372) target = $region48
        $region47: #{tpu_custom_call.1} parent=39 // pred_region
          %s375 = sand.u32 %s27, 1
          %s376 = scalar_lea.sflag [#allocation6], %s375
          %s377 = sand.u32 %s63, 1
          %s378 = smul.addr %s377, 8
          %s379 = scalar_lea.vmem [#allocation5], %s378
          %381 = vsyncadd %s376, 0
          %s382 = smul.addr %s27, 8
          %s383 = scalar_lea.hbm %s1, %s382
          %s385 = sshll.u32 %s383, 4
          %s386 = int_to_ptr.hbm [resolvable:$true] %s385
          %s387 = sshll.u32 %s379, 4
          %s388 = int_to_ptr.vmem [resolvable:$true] %s387
          %390 = dma.hbm_to_vmem [thread:$0]  %s386, 128, %s388, %s376
        $region48: #{tpu_custom_call.1} parent=39 // pred_fallthru
          _
        // Predicated region
        $region49: #{tpu_custom_call.1} parent=39 // pred_check
          %p391 = pneg %p99
        $region50: #{tpu_custom_call.1} parent=39 // pred_check_branch
          %393 = sbr.rel (%p391) target = $region52
        $region51: #{tpu_custom_call.1} parent=39 // pred_region
          %s394 = sand.u32 %s27, 1
          %s395 = scalar_lea.sflag [#allocation6], %s394
          %s396 = sand.u32 %s89, 1
          %s397 = smul.addr %s396, 8
          %s398 = scalar_lea.vmem [#allocation7], %s397
          %400 = vsyncadd %s395, 0
          %s401 = smul.addr %s27, 8
          %s402 = scalar_lea.hbm %s2, %s401
          %s404 = sshll.u32 %s402, 4
          %s405 = int_to_ptr.hbm [resolvable:$true] %s404
          %s406 = sshll.u32 %s398, 4
          %s407 = int_to_ptr.vmem [resolvable:$true] %s406
          %409 = dma.hbm_to_vmem [thread:$0]  %s405, 128, %s407, %s395
        $region52: #{tpu_custom_call.1} parent=39 // pred_fallthru
          _
        // Predicated region
        $region53: #{tpu_custom_call.1} parent=39 // pred_check
          %p410 = pneg %p125
        $region54: #{tpu_custom_call.1} parent=39 // pred_check_branch
          %412 = sbr.rel (%p410) target = $region56
        $region55: #{tpu_custom_call.1} parent=39 // pred_region
          %p413 = scmp.lt.s32.totalorder %s27, 1
          %s414 = scalar_select %p413, %s27, 1
          %s415 = scalar_lea.vmem %s3, %s414
        $region56: #{tpu_custom_call.1} parent=39 // pred_fallthru
          _
      $region40: #{tpu_custom_call.1} parent=5 // pred_fallthru
        _
      %p416 = scmp.le.s32.totalorder 1, %s27
      %p417 = scmp.lt.s32.totalorder %s27, 3
      %p418 = pnand %p416, %p417
      %p419 = pneg %p418
      // Predicated region
      $region57: #{tpu_custom_call.1} parent=5 // pred_check
        _
      $region58: #{tpu_custom_call.1} parent=5 // pred_check_branch
        %421 = sbr.rel (%p418) target = $region60
      $region59: #{tpu_custom_call.1} parent=5 // pred_region
        %s422 = ssub.s32 %s27, 1
        %s423 = sand.u32 %s40, 1
        %s424 = scalar_lea.sflag [#allocation3], %s423
        %s425 = sand.u32 %s40, 1
        %s426 = smul.addr %s425, 8
        %s427 = scalar_lea.vmem [#allocation2], %s426
        // Predicated region
        $region61: #{tpu_custom_call.1} parent=59 // pred_check
          %p428 = pneg %p53
        $region62: #{tpu_custom_call.1} parent=59 // pred_check_branch
          %430 = sbr.rel (%p428) target = $region64
        $region63: #{tpu_custom_call.1} parent=59 // pred_region
          %432 = dma.done %s424, 128
        $region64: #{tpu_custom_call.1} parent=59 // pred_fallthru
          _
        %s433 = sand.u32 %s32, 1
        %s434 = scalar_lea.sflag [#allocation6], %s433
        %s435 = sand.u32 %s66, 1
        %s436 = smul.addr %s435, 8
        %s437 = scalar_lea.vmem [#allocation5], %s436
        // Predicated region
        $region65: #{tpu_custom_call.1} parent=59 // pred_check
          %p438 = pneg %p79
        $region66: #{tpu_custom_call.1} parent=59 // pred_check_branch
          %440 = sbr.rel (%p438) target = $region68
        $region67: #{tpu_custom_call.1} parent=59 // pred_region
          %442 = dma.done %s434, 128
        $region68: #{tpu_custom_call.1} parent=59 // pred_fallthru
          _
        %s443 = sand.u32 %s32, 1
        %s444 = scalar_lea.sflag [#allocation6], %s443
        %s445 = sand.u32 %s92, 1
        %s446 = smul.addr %s445, 8
        %s447 = scalar_lea.vmem [#allocation7], %s446
        // Predicated region
        $region69: #{tpu_custom_call.1} parent=59 // pred_check
          %p448 = pneg %p105
        $region70: #{tpu_custom_call.1} parent=59 // pred_check_branch
          %450 = sbr.rel (%p448) target = $region72
        $region71: #{tpu_custom_call.1} parent=59 // pred_region
          %452 = dma.done %s444, 128
        $region72: #{tpu_custom_call.1} parent=59 // pred_fallthru
          _
        // Predicated region
        $region73: #{tpu_custom_call.1} parent=59 // pred_check
          %p453 = pneg %p152
        $region74: #{tpu_custom_call.1} parent=59 // pred_check_branch
          %455 = sbr.rel (%p453) target = $region76
        $region75: #{tpu_custom_call.1} parent=59 // pred_region
          %457 = dma.done [#allocation9], 256
        $region76: #{tpu_custom_call.1} parent=59 // pred_fallthru
          _
        // Predicated region
        $region77: #{tpu_custom_call.1} parent=59 // pred_check
          %p458 = pneg %p194
        $region78: #{tpu_custom_call.1} parent=59 // pred_check_branch
          %460 = sbr.rel (%p458) target = $region80
        $region79: #{tpu_custom_call.1} parent=59 // pred_region
          %462 = dma.done [#allocation9], 256
        $region80: #{tpu_custom_call.1} parent=59 // pred_fallthru
          _
        // Predicated region
        $region81: #{tpu_custom_call.1} parent=59 // pred_check
          %p463 = pneg %p236
        $region82: #{tpu_custom_call.1} parent=59 // pred_check_branch
          %465 = sbr.rel (%p463) target = $region84
        $region83: #{tpu_custom_call.1} parent=59 // pred_region
          %467 = dma.done [#allocation12], 256
        $region84: #{tpu_custom_call.1} parent=59 // pred_fallthru
          _
        %s468 = sand.u32 %s40, 1
        %s469 = scalar_lea.sflag [#allocation3], %s468
        %s470 = sand.u32 %s40, 1
        %s471 = smul.addr %s470, 8
        %s472 = scalar_lea.vmem [#allocation2], %s471
        %p473 = pneg %p53
        %p474 = pneg %p50
        %s475 = sand.u32 %s32, 1
        %s476 = scalar_lea.sflag [#allocation6], %s475
        %s477 = sand.u32 %s66, 1
        %s478 = smul.addr %s477, 8
        %s479 = scalar_lea.vmem [#allocation5], %s478
        %p480 = pneg %p79
        %p481 = pneg %p76
        %s482 = sand.u32 %s32, 1
        %s483 = scalar_lea.sflag [#allocation6], %s482
        %s484 = sand.u32 %s92, 1
        %s485 = smul.addr %s484, 8
        %s486 = scalar_lea.vmem [#allocation7], %s485
        %p487 = pneg %p105
        %p488 = pneg %p102
        %p489 = scmp.lt.s32.totalorder %s32, 1
        %s490 = scalar_select %p489, %s32, 1
        %s491 = scalar_lea.vmem %s3, %s490
        %p492 = pneg %p131
        %p493 = pneg %p128
        %p494 = pneg %p152
        %p495 = pneg %p149
        %p496 = pneg %p173
        %p497 = pneg %p170
        %p498 = pneg %p194
        %p499 = pneg %p191
        %p500 = pneg %p215
        %p501 = pneg %p212
        %p502 = pneg %p236
        %p503 = pneg %p233
        %p504 = pneg %p257
        %p505 = pneg %p254
        %p506 = pneg %p283
        %p507 = pneg %p280
        %s508 = sand.u32 %s270, 1
        %s509 = scalar_lea.sflag [#allocation4], %s508
        %s510 = sand.u32 %s270, 1
        %s511 = smul.addr %s510, 8
        %s512 = scalar_lea.vmem [#allocation13], %s511
        %p513 = scmp.lt.s32.totalorder %s32, 1
        %s514 = scalar_select %p513, %s32, 1
        %s515 = scalar_lea.vmem %s3, %s514
        %v517 = vld [vmem:[%s427] sm:$0xff]
        %v518 = vld [vmem:[%s437] sm:$0xff]
        %v519 = vld [vmem:[%s447] sm:$0xff]
        %v520 = vld [vmem:[%s515] sm:$0x1]
        %vm521 = vcmp.ne.s32.totalorder %v520, 0
        %v522 = vld [vmem:[#allocation8] sm:$0xff]
        %v523 = vld [vmem:[#allocation8 + $0x8] sm:$0xff]
        %v524 = vld [vmem:[%s5] sm:$0x1]
        %v526 = vperm.slane %v524, 0
        %vm528 = vcmask 130048
        %v530 = vsel %vm528, %v517, 0
        %532 = vmatpush.msra.mxu0 0.0
        %533 = vmatpush.msra.mxu0 0.0
        %534 = vmatpush.msra.mxu0 0.0
        %535 = vmatpush.msra.mxu0 0.0
        %536 = vmatpush.msra.mxu0 0.0
        %537 = vmatpush.msra.mxu0 0.0
        %538 = vmatpush.msra.mxu0 0.0
        %539 = vmatpush.msra.mxu0 0.0
        %540 = vmatpush.msra.mxu0 0.0
        %541 = vmatpush.msra.mxu0 0.0
        %542 = vmatpush.msra.mxu0 0.0
        %543 = vmatpush.msra.mxu0 0.0
        %544 = vmatpush.msra.mxu0 0.0
        %545 = vmatpush.msra.mxu0 0.0
        %546 = vmatpush.msra.mxu0 %v523
        %547 = vmatpush.msra.mxu0 %v522
        %548 = vmatmul.f32.gmra.mxu0 %v530
        %v549 = vpop.f32.mrf.mxu0
        %v550 = vadd.f32 %v526, %v549
        %551 = vdwg.mxu0
        %v552 = vld [vmem:[#allocation10] sm:$0xff]
        %v553 = vld [vmem:[#allocation10 + $0x8] sm:$0xff]
        %v554 = vld [vmem:[%s7] sm:$0x1]
        %v556 = vperm.slane %v554, 0
        %v559 = vsel %vm528, %v518, 0
        %561 = vmatpush.msra.mxu0 0.0
        %562 = vmatpush.msra.mxu0 0.0
        %563 = vmatpush.msra.mxu0 0.0
        %564 = vmatpush.msra.mxu0 0.0
        %565 = vmatpush.msra.mxu0 0.0
        %566 = vmatpush.msra.mxu0 0.0
        %567 = vmatpush.msra.mxu0 0.0
        %568 = vmatpush.msra.mxu0 0.0
        %569 = vmatpush.msra.mxu0 0.0
        %570 = vmatpush.msra.mxu0 0.0
        %571 = vmatpush.msra.mxu0 0.0
        %572 = vmatpush.msra.mxu0 0.0
        %573 = vmatpush.msra.mxu0 0.0
        %574 = vmatpush.msra.mxu0 0.0
        %575 = vmatpush.msra.mxu0 %v553
        %576 = vmatpush.msra.mxu0 %v552
        %577 = vmatmul.f32.gmra.mxu0 %v559
        %v578 = vpop.f32.mrf.mxu0
        %v579 = vadd.f32 %v556, %v578
        %580 = vdwg.mxu0
        %v581 = vld [vmem:[#allocation11] sm:$0xff]
        %v582 = vld [vmem:[#allocation11 + $0x8] sm:$0xff]
        %v583 = vld [vmem:[%s9] sm:$0x1]
        %v585 = vperm.slane %v583, 0
        %v588 = vsel %vm528, %v519, 0
        %590 = vmatpush.msra.mxu0 0.0
        %591 = vmatpush.msra.mxu0 0.0
        %592 = vmatpush.msra.mxu0 0.0
        %593 = vmatpush.msra.mxu0 0.0
        %594 = vmatpush.msra.mxu0 0.0
        %595 = vmatpush.msra.mxu0 0.0
        %596 = vmatpush.msra.mxu0 0.0
        %597 = vmatpush.msra.mxu0 0.0
        %598 = vmatpush.msra.mxu0 0.0
        %599 = vmatpush.msra.mxu0 0.0
        %600 = vmatpush.msra.mxu0 0.0
        %601 = vmatpush.msra.mxu0 0.0
        %602 = vmatpush.msra.mxu0 0.0
        %603 = vmatpush.msra.mxu0 0.0
        %604 = vmatpush.msra.mxu0 %v582
        %605 = vmatpush.msra.mxu0 %v581
        %606 = vmatmul.f32.gmra.mxu0 %v588
        %v607 = vpop.f32.mrf.mxu0
        %v608 = vadd.f32 %v585, %v607
        %609 = vdwg.mxu0
        %v610 = vmul.f32 %v550, 0.35355338
        %v611 = vpack.c.bf16 %v610, %v610
        %v612 = vpack.c.bf16 %v579, %v579
        %v613 = vpack.c.bf16 %v608, %v608
        %vm614 = vcmask 64512
        %v616 = vsel %vm614, %v611, 0
        %v619 = vsel %vm614, %v612, 0
        %621 = vmatpush.bf16.xpose.msra.mxu0 0
        %622 = vmatpush.bf16.xpose.msra.mxu0 0
        %623 = vmatpush.bf16.xpose.msra.mxu0 0
        %624 = vmatpush.bf16.xpose.msra.mxu0 0
        %625 = vmatpush.bf16.xpose.msra.mxu0 0
        %626 = vmatpush.bf16.xpose.msra.mxu0 0
        %627 = vmatpush.bf16.xpose.msra.mxu0 0
        %628 = vmatpush.bf16.xpose.msra.mxu0 %v619
        %629 = vmatmul.bf16.gmra.mxu0 %v616
        %v630 = vpop.f32.mrf.mxu0
        %v631 = vadd.f32 0.0, %v630
        %v632 = vpop.f32.mrf.mxu0
        %633 = vdwg.mxu0
        %v634 = vsel %vm521, 1, 0
        %v635 = vperm.slane %v634, 0
        %vm636 = vcmp.eq.s32.totalorder %v635, 1
        %v637 = vsel %vm636, %v631, -inf
        %v638 = vsel %vm614, %v637, -inf
        %639 = vmax.xlane.f32.xlu0 %v638
        %v640 = vpop.xlane.xlu0 %639
        %v641 = vsub.f32 %v637, %v640
        %v642 = vmul.f32 %v641, 1.442695
        %v643 = vpow.pop %v642
        %v644 = vsel %vm614, %v643, 0.0
        %645 = vadd.xlane.f32.xlu0 %v644
        %v646 = vpop.xlane.xlu0 %645
        %v647 = vrcp.pop %v646
        %v648 = vmul.f32 %v643, %v647
        %v649 = vpack.c.bf16 %v648, %v648
        %v651 = vsel %vm614, %v649, 0
        %vm653 = vcmask 1043456
        %v655 = vsel %vm653, %v613, 0
        %657 = vmatpush.bf16.msra.mxu0 0
        %658 = vmatpush.bf16.msra.mxu0 0
        %659 = vmatpush.bf16.msra.mxu0 0
        %660 = vmatpush.bf16.msra.mxu0 0
        %661 = vmatpush.bf16.msra.mxu0 0
        %662 = vmatpush.bf16.msra.mxu0 0
        %663 = vmatpush.bf16.msra.mxu0 0
        %664 = vmatpush.bf16.msra.mxu0 %v655
        %665 = vmatmul.bf16.gmra.mxu0 %v651
        %v666 = vpop.f32.mrf.mxu0
        %v667 = vadd.f32 0.0, %v666
        %v668 = vpop.f32.mrf.mxu0
        %669 = vdwg.mxu0
        %v671 = vunpack.c.l.b16 %v611
        %v672 = vpack.c.b16 %v671, %v671
        %673 = vrot.lane.b32.xlu0 %v672, 120
        %v674 = vpop.permute.xlu0 %673
        %v676 = vunpack.c.l.b16 %v612
        %v677 = vpack.c.b16 %v676, %v676
        %678 = vrot.lane.b32.xlu0 %v677, 120
        %v679 = vpop.permute.xlu0 %678
        %v681 = vsel %vm614, %v674, 0
        %v684 = vsel %vm614, %v679, 0
        %686 = vmatpush.bf16.xpose.msra.mxu0 0
        %687 = vmatpush.bf16.xpose.msra.mxu0 0
        %688 = vmatpush.bf16.xpose.msra.mxu0 0
        %689 = vmatpush.bf16.xpose.msra.mxu0 0
        %690 = vmatpush.bf16.xpose.msra.mxu0 0
        %691 = vmatpush.bf16.xpose.msra.mxu0 0
        %692 = vmatpush.bf16.xpose.msra.mxu0 0
        %693 = vmatpush.bf16.xpose.msra.mxu0 %v684
        %694 = vmatmul.bf16.gmra.mxu0 %v681
        %v695 = vpop.f32.mrf.mxu0
        %v696 = vadd.f32 0.0, %v695
        %v697 = vpop.f32.mrf.mxu0
        %698 = vdwg.mxu0
        %v699 = vsel %vm636, %v696, -inf
        %v700 = vsel %vm614, %v699, -inf
        %701 = vmax.xlane.f32.xlu0 %v700
        %v702 = vpop.xlane.xlu0 %701
        %v703 = vsub.f32 %v699, %v702
        %v704 = vmul.f32 %v703, 1.442695
        %v705 = vpow.pop %v704
        %v706 = vsel %vm614, %v705, 0.0
        %707 = vadd.xlane.f32.xlu0 %v706
        %v708 = vpop.xlane.xlu0 %707
        %v709 = vrcp.pop %v708
        %v710 = vmul.f32 %v705, %v709
        %v711 = vpack.c.bf16 %v710, %v710
        %v713 = vunpack.c.l.b16 %v613
        %v714 = vpack.c.b16 %v713, %v713
        %715 = vrot.lane.b32.xlu0 %v714, 120
        %v716 = vpop.permute.xlu0 %715
        %v718 = vsel %vm614, %v711, 0
        %v721 = vsel %vm653, %v716, 0
        %723 = vmatpush.bf16.msra.mxu0 0
        %724 = vmatpush.bf16.msra.mxu0 0
        %725 = vmatpush.bf16.msra.mxu0 0
        %726 = vmatpush.bf16.msra.mxu0 0
        %727 = vmatpush.bf16.msra.mxu0 0
        %728 = vmatpush.bf16.msra.mxu0 0
        %729 = vmatpush.bf16.msra.mxu0 0
        %730 = vmatpush.bf16.msra.mxu0 %v721
        %731 = vmatmul.bf16.gmra.mxu0 %v718
        %v732 = vpop.f32.mrf.mxu0
        %v733 = vadd.f32 0.0, %v732
        %v734 = vpop.f32.mrf.mxu0
        %735 = vdwg.mxu0
        %737 = vrot.lane.b32.xlu0 %v733, 8
        %v738 = vpop.permute.xlu0 %737
        %v740 = vsel %vm614, %v667, %v738
        %741 = vst.msk [vmem:[%s512] sm:$0xff] %vm528, %v740
        %s742 = sand.u32 %s270, 1
        %s743 = scalar_lea.sflag [#allocation4], %s742
        %s744 = sand.u32 %s270, 1
        %s745 = smul.addr %s744, 8
        %s746 = scalar_lea.vmem [#allocation13], %s745
        // Predicated region
        $region85: #{tpu_custom_call.1} parent=59 // pred_check
          %p747 = pneg %p280
        $region86: #{tpu_custom_call.1} parent=59 // pred_check_branch
          %749 = sbr.rel (%p747) target = $region88
        $region87: #{tpu_custom_call.1} parent=59 // pred_region
          %751 = vsyncadd %s743, 0
          %s752 = smul.addr %s32, 8
          %s753 = scalar_lea.hbm %s10, %s752
          %s755 = sshll.u32 %s746, 4
          %s756 = int_to_ptr.vmem [resolvable:$true] %s755
          %s757 = sshll.u32 %s753, 4
          %s758 = int_to_ptr.hbm [resolvable:$true] %s757
          %760 = dma.vmem_to_hbm [thread:$0]  %s756, 128, %s758, %s743
        $region88: #{tpu_custom_call.1} parent=59 // pred_fallthru
          _
      $region60: #{tpu_custom_call.1} parent=5 // pred_fallthru
        _
      %p761 = scmp.le.s32.totalorder 2, %s27
      // Predicated region
      $region89: #{tpu_custom_call.1} parent=5 // pred_check
        %p762 = pneg %p761
      $region90: #{tpu_custom_call.1} parent=5 // pred_check_branch
        %764 = sbr.rel (%p762) target = $region92
      $region91: #{tpu_custom_call.1} parent=5 // pred_region
        %s765 = ssub.s32 %s27, 2
        // Predicated region
        $region93: #{tpu_custom_call.1} parent=91 // pred_check
          %p766 = pneg %p286
        $region94: #{tpu_custom_call.1} parent=91 // pred_check_branch
          %768 = sbr.rel (%p766) target = $region96
        $region95: #{tpu_custom_call.1} parent=91 // pred_region
          %s769 = sand.u32 %s271, 1
          %s770 = scalar_lea.sflag [#allocation4], %s769
          %s771 = sand.u32 %s271, 1
          %s772 = smul.addr %s771, 8
          %s773 = scalar_lea.vmem [#allocation13], %s772
          %775 = dma.done %s770, 128
        $region96: #{tpu_custom_call.1} parent=91 // pred_fallthru
          _
      $region92: #{tpu_custom_call.1} parent=5 // pred_fallthru
        _
    $region6: #{tpu_custom_call.1} parent=1 // loop_footer
      %s31 = sadd.s32 1, %s27
    $region7: #{tpu_custom_call.1} parent=1 // loop_footer_branch
      %26 = sbr.rel target = $region3
    $region8: #{tpu_custom_call.1} parent=1 // loop_exit
      _
    %776 = vsyncpa [#allocation3], 1
    %s777 = scalar_lea.sflag [#allocation3], 1
    %778 = vsyncpa %s777, 1
    %779 = vsyncpa [#allocation6], 1
    %s780 = scalar_lea.sflag [#allocation6], 1
    %781 = vsyncpa %s780, 1
    %782 = vsyncpa [#allocation9], 1
    %783 = vsyncpa [#allocation12], 1
    %784 = vsyncpa [#allocation4], 1
    %s785 = scalar_lea.sflag [#allocation4], 1
    %786 = vsyncpa %s785, 1

</llo_original>
